<compile_context>
chip_gen: v7x
topology: tpu7x:2x2x1
jax: 0.10.0
libtpu: 0.0.40
codegen_flags: <defaults>
</compile_context>

<pallas_src>
import functools

import jax
import jax.numpy as jnp
from jax.experimental import pallas as pl
from jax.experimental.pallas import tpu as pltpu

ALPHA = 0.05          # module default alpha
LANES = 128           # lane width
MAX_TR = 1024         # sublane rows per grid step
MAX_PARTS = 2         # leading "parallel" partitions (v7x: 2 TensorCores/chip)


def _cdiv(a, b):
    return -(-a // b)


def _round_up(a, b):
    return _cdiv(a, b) * b


def _num_tensorcores() -> int:
    """Best-effort TensorCore-per-chip count (v7x/v5p/v4: 2, v5e/v6e: 1)."""
    try:
        info = pltpu.get_tpu_info()
        for attr in ("num_cores", "core_count", "num_tensorcores",
                     "tensorcore_count"):
            v = getattr(info, attr, None)
            if isinstance(v, int) and 1 <= v <= 8:
                return v
    except Exception:
        pass
    try:
        kind = jax.devices()[0].device_kind.lower()
    except Exception:
        return 1
    if any(t in kind for t in ("lite", "v5e", "v6e")):
        return 1
    if any(t in kind for t in ("v7", "tpu7", "v5p", "v4")):
        return 2
    return 1


_NUM_TC = _num_tensorcores()


def _bce_blur_kernel(pred_ref, true_ref, out_ref, *, tr, lanes, bpp,
                     n_valid, ragged, inv_denom):
    """One (tr, lanes) tile of BCE-blur loss, folded into the (8, lanes) out block."""
    p = pl.program_id(0)
    j = pl.program_id(1)

    @pl.when(j == 0)
    def _():
        out_ref[...] = jnp.zeros_like(out_ref)

    x = pred_ref[...].astype(jnp.float32)
    y = true_ref[...].astype(jnp.float32)

    # Numerically-stable BCEWithLogitsLoss(reduction='none'):
    #   bce = max(x, 0) - x*y + log(1 + exp(-|x|))
    # e = exp(-|x|) is reused below for the sigmoid (one fewer EUP op/element).
    e = jnp.exp(-jnp.abs(x))
    bce = jnp.maximum(x, 0.0) - x * y + jnp.log(1.0 + e)

    # sigmoid(x) = 1/(1+e) for x >= 0, e/(1+e) for x < 0.
    # approx reciprocal: single EUP vrcp, no VPU Newton steps (v7x is VALU-bound).
    r = pl.reciprocal(1.0 + e, approx=True)
    sig = jnp.where(x >= 0.0, r, e * r)

    # Blur factor: reduce effect of missing labels.
    alpha_factor = 1.0 - jnp.exp((sig - y - 1.0) * inv_denom)
    loss = bce * alpha_factor

    def fold(v):
        # Sublane-grouped partial sum into the resident accumulator output
        # block.  Balanced pairwise tree keeps the dependent-add chain at
        # O(log(tr/8)) depth (pure VPU adds; each chunk is one (8,128) tile).
        t = v.reshape(tr // 8, 8, lanes)
        chunks = [t[i] for i in range(tr // 8)]
        while len(chunks) > 1:
            nxt = [a + b for a, b in zip(chunks[0::2], chunks[1::2])]
            if len(chunks) % 2:
                nxt.append(chunks[-1])
            chunks = nxt
        out_ref[...] += chunks[0]

    if not ragged:
        fold(loss)
    else:
        gidx = p * bpp + j                       # global row-block index
        full_blocks = n_valid // (tr * lanes)    # blocks entirely inside data

        @pl.when(gidx < full_blocks)
        def _():                                 # bulk: no masking cost
            fold(loss)

        @pl.when(gidx >= full_blocks)
        def _():                                 # tail / overflow blocks only
            rows_full = n_valid // lanes         # fully-valid rows (global)
            lanes_last = n_valid % lanes         # valid lanes in the last row
            gr = gidx * tr + jax.lax.broadcasted_iota(jnp.int32, (tr, lanes), 0)
            mask = gr < rows_full
            if lanes_last:
                li = jax.lax.broadcasted_iota(jnp.int32, (tr, lanes), 1)
                mask = mask | ((gr == rows_full) & (li < lanes_last))
            fold(jnp.where(mask, loss, 0.0))


@functools.partial(jax.jit, static_argnames=("alpha",))
def bce_blur_with_logits_loss(pred, true, alpha=ALPHA):
    """Mean BCE-blur loss over all elements of pred/true (same shape, any rank)."""
    assert pred.shape == true.shape
    n = pred.size                                   # static under jit

    p_flat = pred.reshape(-1)                       # native dtype; cast in-kernel
    t_flat = true.reshape(-1)

    if n % LANES != 0 or n < 8 * LANES:
        # TODO(synk): lane-unaligned n still needs one padded copy; a zero-copy
        # path would require 1-D streaming + in-kernel relayout.  Pad values are
        # irrelevant -- padded elements are masked out inside the kernel.
        n_pad = _round_up(max(n, 1), 8 * LANES)
        p_flat = jnp.pad(p_flat, (0, n_pad - n))
        t_flat = jnp.pad(t_flat, (0, n_pad - n))
    else:
        n_pad = n                                   # free reshape view, no copy

    rows = n_pad // LANES
    tr = min(MAX_TR, (rows // 8) * 8)               # block rows, multiple of 8
    blocks_raw = _cdiv(rows, tr)

    # Megacore split only on multi-TC chips (v7x); always take it when there
    # are >= 2 blocks -- overflow/partial blocks are masked in-kernel, so the
    # split never forces padding.
    parts = MAX_PARTS if (_NUM_TC >= 2 and blocks_raw >= 2) else 1
    bpp = _cdiv(blocks_raw, parts)

    p2 = p_flat.reshape(rows, LANES)
    t2 = t_flat.reshape(rows, LANES)

    ragged = (parts * bpp * tr * LANES) != n        # static: any masking needed?

    kernel = functools.partial(
        _bce_blur_kernel, tr=tr, lanes=LANES, bpp=bpp, n_valid=n,
        ragged=ragged, inv_denom=1.0 / (alpha + 0.0001))

    def in_map(p, j):
        # Clamp overflow blocks of an uneven split to the last valid block; the
        # in-kernel mask zeroes their contribution.
        return (jnp.minimum(p * bpp + j, blocks_raw - 1), 0)

    partials = pl.pallas_call(
        kernel,
        out_shape=jax.ShapeDtypeStruct((parts * 8, LANES), jnp.float32),
        grid_spec=pltpu.PrefetchScalarGridSpec(
            num_scalar_prefetch=0,
            grid=(parts, bpp),
            in_specs=[
                pl.BlockSpec((tr, LANES), in_map),
                pl.BlockSpec((tr, LANES), in_map),
            ],
            out_specs=pl.BlockSpec((8, LANES), lambda p, j: (p, 0)),
        ),
        compiler_params=pltpu.CompilerParams(
            dimension_semantics=("parallel", "arbitrary"),
            vmem_limit_bytes=32 * 1024 * 1024),
    )(p2, t2)

    # Tiny epilogue: cross-lane reduce of the per-partition partial sums + mean.
    return jnp.sum(partials) / n


def _reference(pred, true, alpha=ALPHA):
    """Direct JAX translation of the PyTorch module (f32)."""
    x = pred.astype(jnp.float32)
    y = true.astype(jnp.float32)
    loss = jnp.maximum(x, 0.0) - x * y + jnp.log1p(jnp.exp(-jnp.abs(x)))
    p = jax.nn.sigmoid(x)
    dx = p - y
    loss = loss * (1.0 - jnp.exp((dx - 1.0) / (alpha + 0.0001)))
    return jnp.mean(loss)


if __name__ == "__main__":
    key = jax.random.PRNGKey(0)

    # (B, C, H, W) logits maps.  Cases: exact-fit single block, lane-ragged
    # (pad+mask path), exact multi-of-1024 single block, and multi-block with
    # a row-ragged tail (masked last block; 2-way partition on v7x).
    test_shapes = [(2, 4, 16, 16), (3, 5, 20, 20), (4, 8, 64, 64), (3, 8, 96, 96)]

    ok = True
    for shape in test_shapes:
        key, k1, k2 = jax.random.split(key, 3)
        pred = jax.random.normal(k1, shape, dtype=jnp.float32) * 2.0
        true = jax.random.bernoulli(k2, p=0.3, shape=shape).astype(jnp.float32)

        loss = jax.block_until_ready(bce_blur_with_logits_loss(pred, true))
        ref = _reference(pred, true)
        # Tolerance covers the approx-reciprocal sigmoid (<~1e-3 rel on the
        # mean); any structural bug (masking/double-count) is orders larger.
        if not jnp.allclose(loss, ref, rtol=2e-3, atol=1e-6):
            ok = False
            print("MISMATCH", shape, float(loss), float(ref))

    if ok:
        print("KERNEL_OK")
</pallas_src>

<mosaic_0001>
module attributes {stable_mosaic.version = 11 : i64} {
  func.func @_bce_blur_kernel(%arg0: i32, %arg1: i32, %arg2: memref<16x128xf32, #tpu.memory_space<vmem>>, %arg3: memref<16x128xf32, #tpu.memory_space<vmem>>, %arg4: memref<8x128xf32, #tpu.memory_space<vmem>>) attributes {dimension_semantics = [#tpu.dimension_semantics<parallel>, #tpu.dimension_semantics<arbitrary>], iteration_bounds = array<i64: 1, 1>, scalar_prefetch = 0 : i64, scratch_operands = 0 : i64, tpu.core_type = #tpu.core_type<tc>, window_params = [{transform_indices = @transform_0, window_bounds = array<i64: 16, 128>}, {transform_indices = @transform_1, window_bounds = array<i64: 16, 128>}, {transform_indices = @transform_2, window_bounds = array<i64: 8, 128>}]} {
    %c0_i32 = arith.constant 0 : i32
    %0 = arith.cmpi eq, %arg1, %c0_i32 : i32
    %1 = arith.extui %0 : i1 to i32
    %c0_i32_0 = arith.constant 0 : i32
    %2 = arith.cmpi ne, %1, %c0_i32_0 : i32
    scf.if %2 {
      %cst_15 = arith.constant 0.000000e+00 : f32
      %42 = vector.broadcast %cst_15 : f32 to vector<8x128xf32>
      %c0_16 = arith.constant 0 : index
      %c0_17 = arith.constant 0 : index
      %43 = vector.load %arg4[%c0_16, %c0_17] : memref<8x128xf32, #tpu.memory_space<vmem>>, vector<8x128xf32>
      tpu.vector_store %arg4[%c0_16, %c0_17], %42 {strides = array<i32>} : memref<8x128xf32, #tpu.memory_space<vmem>>, vector<8x128xf32>,
    } else {
    }
    %c0 = arith.constant 0 : index
    %c0_1 = arith.constant 0 : index
    %3 = vector.load %arg2[%c0, %c0_1] : memref<16x128xf32, #tpu.memory_space<vmem>>, vector<16x128xf32>
    %c0_2 = arith.constant 0 : index
    %c0_3 = arith.constant 0 : index
    %4 = vector.load %arg3[%c0_2, %c0_3] : memref<16x128xf32, #tpu.memory_space<vmem>>, vector<16x128xf32>
    %5 = math.absf %3 : vector<16x128xf32>
    %cst = arith.constant 0.000000e+00 : f32
    %6 = vector.broadcast %cst : f32 to vector<16x128xf32>
    %7 = arith.subf %6, %5 : vector<16x128xf32>
    %8 = math.exp %7 : vector<16x128xf32>
    %cst_4 = arith.constant 0.000000e+00 : f32
    %9 = vector.broadcast %cst_4 : f32 to vector<16x128xf32>
    %10 = arith.maximumf %3, %9 : vector<16x128xf32>
    %11 = arith.mulf %3, %4 : vector<16x128xf32>
    %12 = arith.subf %10, %11 : vector<16x128xf32>
    %cst_5 = arith.constant 1.000000e+00 : f32
    %13 = vector.broadcast %cst_5 : f32 to vector<16x128xf32>
    %14 = arith.addf %13, %8 : vector<16x128xf32>
    %15 = math.log %14 : vector<16x128xf32>
    %16 = arith.addf %12, %15 : vector<16x128xf32>
    %cst_6 = arith.constant 1.000000e+00 : f32
    %17 = vector.broadcast %cst_6 : f32 to vector<16x128xf32>
    %18 = arith.addf %17, %8 : vector<16x128xf32>
    %19 = tpu.reciprocal %18 {approx = true} : vector<16x128xf32> -> vector<16x128xf32>
    %cst_7 = arith.constant 0.000000e+00 : f32
    %20 = vector.broadcast %cst_7 : f32 to vector<16x128xf32>
    %21 = arith.cmpf oge, %3, %20 : vector<16x128xf32>
    %22 = arith.mulf %8, %19 : vector<16x128xf32>
    %23 = arith.select %21, %19, %22 : vector<16x128xi1>, vector<16x128xf32>
    %24 = arith.subf %23, %4 : vector<16x128xf32>
    %cst_8 = arith.constant 1.000000e+00 : f32
    %25 = vector.broadcast %cst_8 : f32 to vector<16x128xf32>
    %26 = arith.subf %24, %25 : vector<16x128xf32>
    %cst_9 = arith.constant 19.9600792 : f32
    %27 = vector.broadcast %cst_9 : f32 to vector<16x128xf32>
    %28 = arith.mulf %26, %27 : vector<16x128xf32>
    %29 = math.exp %28 : vector<16x128xf32>
    %cst_10 = arith.constant 1.000000e+00 : f32
    %30 = vector.broadcast %cst_10 : f32 to vector<16x128xf32>
    %31 = arith.subf %30, %29 : vector<16x128xf32>
    %32 = arith.mulf %16, %31 : vector<16x128xf32>
    %33 = vector.shape_cast %32 : vector<16x128xf32> to vector<2x8x128xf32>
    %34 = vector.extract_strided_slice %33 {offsets = [0, 0, 0], sizes = [1, 8, 128], strides = [1, 1, 1]} : vector<2x8x128xf32> to vector<1x8x128xf32>
    %35 = vector.shape_cast %34 : vector<1x8x128xf32> to vector<8x128xf32>
    %36 = vector.extract_strided_slice %33 {offsets = [1, 0, 0], sizes = [1, 8, 128], strides = [1, 1, 1]} : vector<2x8x128xf32> to vector<1x8x128xf32>
    %37 = vector.shape_cast %36 : vector<1x8x128xf32> to vector<8x128xf32>
    %38 = arith.addf %35, %37 : vector<8x128xf32>
    %c0_11 = arith.constant 0 : index
    %c0_12 = arith.constant 0 : index
    %39 = vector.load %arg4[%c0_11, %c0_12] : memref<8x128xf32, #tpu.memory_space<vmem>>, vector<8x128xf32>
    %40 = arith.addf %39, %38 : vector<8x128xf32>
    %c0_13 = arith.constant 0 : index
    %c0_14 = arith.constant 0 : index
    %41 = vector.load %arg4[%c0_13, %c0_14] : memref<8x128xf32, #tpu.memory_space<vmem>>, vector<8x128xf32>
    tpu.vector_store %arg4[%c0_13, %c0_14], %40 {strides = array<i32>} : memref<8x128xf32, #tpu.memory_space<vmem>>, vector<8x128xf32>,
    return
  }
  func.func @transform_0(%arg0: i32, %arg1: i32) -> (i32, i32) {
    %c1_i32 = arith.constant 1 : i32
    %0 = arith.muli %arg0, %c1_i32 : i32
    %1 = arith.addi %0, %arg1 : i32
    %c0_i32 = arith.constant 0 : i32
    %2 = arith.minsi %1, %c0_i32 : i32
    %c0_i32_0 = arith.constant 0 : i32
    %c0_i32_1 = arith.constant 0 : i32
    return %2, %c0_i32_0 : i32, i32
  }
  func.func @transform_1(%arg0: i32, %arg1: i32) -> (i32, i32) {
    %c1_i32 = arith.constant 1 : i32
    %0 = arith.muli %arg0, %c1_i32 : i32
    %1 = arith.addi %0, %arg1 : i32
    %c0_i32 = arith.constant 0 : i32
    %2 = arith.minsi %1, %c0_i32 : i32
    %c0_i32_0 = arith.constant 0 : i32
    %c0_i32_1 = arith.constant 0 : i32
    return %2, %c0_i32_0 : i32, i32
  }
  func.func @transform_2(%arg0: i32, %arg1: i32) -> (i32, i32) {
    %c0_i32 = arith.constant 0 : i32
    %c0_i32_0 = arith.constant 0 : i32
    return %arg0, %c0_i32 : i32, i32
  }
}

</mosaic_0001>

<llo_original>
// kernel: bce_blur_with_logits_loss.1
$region0: #{bce_blur_with_logits_loss.1}
  #allocation0 [shape = 'u32[]', space=smem, size = 0x4, offset = 0x4, fixed_abs, tag = 'smem constant byte address 0x4 - core index']
  #allocation1 [shape = 'u32[144,128]{1,0:T(1,128)}', space=vmem, size = 0x12000, scoped, tag = 'internal scratch']
  %s0 = inlined_call_operand.vmem [shape: f32[16,128], index: 0, kind: input, shape index: {}]
  %s1 = inlined_call_operand.vmem [shape: f32[16,128], index: 1, kind: input, shape index: {}]
  %s2 = inlined_call_operand.vmem [shape: f32[8,128], index: 2, kind: output, shape index: {}]
  %s3 = sld [smem:[#allocation0]]
  $region22: #{bce_blur_with_logits_loss.1} parent=0
    _
  %s5 = ssub.s32 1, %s3
  %s6 = scalar_select 0, %s5, %s3
  // Predicated region
  $region2: #{bce_blur_with_logits_loss.1} parent=0 // pred_check
    _
  $region3: #{bce_blur_with_logits_loss.1} parent=0 // pred_check_branch
    %8 = sbr.rel (0) target = $region5
  $region4: #{bce_blur_with_logits_loss.1} parent=0 // pred_region
    %s9 = sadd.s32 0, 0
    %p10 = scmp.lt.s32.totalorder %s9, 0
    %s11 = scalar_select %p10, %s9, 0
    %s12 = smul.u32 2, %s11
    %p13 = scmp.lt.s32.totalorder %s12, 1
    %s14 = scalar_select %p13, %s12, 1
    %s15 = smul.addr %s14, 8
    %s16 = scalar_lea.vmem %s0, %s15
    %s17 = sadd.s32 0, 0
    %p18 = scmp.lt.s32.totalorder %s17, 0
    %s19 = scalar_select %p18, %s17, 0
    %s20 = smul.u32 2, %s19
  $region5: #{bce_blur_with_logits_loss.1} parent=0 // pred_fallthru
    _
  // Predicated region
  $region6: #{bce_blur_with_logits_loss.1} parent=0 // pred_check
    _
  $region7: #{bce_blur_with_logits_loss.1} parent=0 // pred_check_branch
    %22 = sbr.rel (0) target = $region9
  $region8: #{bce_blur_with_logits_loss.1} parent=0 // pred_region
    %s23 = sadd.s32 0, 0
    %p24 = scmp.lt.s32.totalorder %s23, 0
    %s25 = scalar_select %p24, %s23, 0
    %s26 = smul.u32 2, %s25
    %p27 = scmp.lt.s32.totalorder %s26, 1
    %s28 = scalar_select %p27, %s26, 1
    %s29 = smul.addr %s28, 8
    %s30 = scalar_lea.vmem %s1, %s29
    %s31 = sadd.s32 0, 0
    %p32 = scmp.lt.s32.totalorder %s31, 0
    %s33 = scalar_select %p32, %s31, 0
    %s34 = smul.u32 2, %s33
  $region9: #{bce_blur_with_logits_loss.1} parent=0 // pred_fallthru
    _
  %s35 = sadd.s32 0, 0
  %p36 = scmp.lt.s32.totalorder %s35, 0
  %s37 = scalar_select %p36, %s35, 0
  %s38 = smul.u32 2, %s37
  %p39 = scmp.lt.s32.totalorder %s38, 1
  %s40 = scalar_select %p39, %s38, 1
  %s41 = smul.addr %s40, 8
  %s42 = scalar_lea.vmem %s0, %s41
  %s43 = sadd.s32 0, 0
  %p44 = scmp.lt.s32.totalorder %s43, 0
  %s45 = scalar_select %p44, %s43, 0
  %s46 = smul.u32 2, %s45
  %p47 = scmp.lt.s32.totalorder %s46, 1
  %s48 = scalar_select %p47, %s46, 1
  %s49 = smul.addr %s48, 8
  %s50 = scalar_lea.vmem %s1, %s49
  %s51 = sadd.s32 0, 0
  %p52 = scmp.lt.s32.totalorder %s51, 0
  %s53 = scalar_select %p52, %s51, 0
  %s54 = smul.u32 2, %s53
  %p55 = scmp.lt.s32.totalorder %s54, 1
  %s56 = scalar_select %p55, %s54, 1
  %s57 = smul.addr %s56, 8
  %s58 = scalar_lea.vmem %s0, %s57
  %s59 = sadd.s32 0, 0
  %p60 = scmp.lt.s32.totalorder %s59, 0
  %s61 = scalar_select %p60, %s59, 0
  %s62 = smul.u32 2, %s61
  %s63 = sadd.s32 0, 0
  %p64 = scmp.lt.s32.totalorder %s63, 0
  %s65 = scalar_select %p64, %s63, 0
  %s66 = smul.u32 2, %s65
  %p67 = scmp.lt.s32.totalorder %s66, 1
  %s68 = scalar_select %p67, %s66, 1
  %s69 = smul.addr %s68, 8
  %s70 = scalar_lea.vmem %s1, %s69
  %s71 = sadd.s32 0, 0
  %p72 = scmp.lt.s32.totalorder %s71, 0
  %s73 = scalar_select %p72, %s71, 0
  %s74 = smul.u32 2, %s73
  %p75 = scmp.eq.s32.totalorder 0, 0
  // Predicated region
  $region10: #{bce_blur_with_logits_loss.1} parent=0 // pred_check
    %p76 = pneg %p75
  $region11: #{bce_blur_with_logits_loss.1} parent=0 // pred_check_branch
    %78 = sbr.rel (%p76) target = $region13
  $region12: #{bce_blur_with_logits_loss.1} parent=0 // pred_region
    %79 = vst [vmem:[%s2] sm:$0xff] 0.0
  $region13: #{bce_blur_with_logits_loss.1} parent=0 // pred_fallthru
    _
  %v80 = vld [vmem:[%s58] sm:$0xff]
  %v81 = vld [vmem:[%s58 + $0x8] sm:$0xff]
  %v82 = vld [vmem:[%s70] sm:$0xff]
  %v83 = vld [vmem:[%s70 + $0x8] sm:$0xff]
  %v84 = vand.u32 2147483647, %v80
  %v85 = vand.u32 2147483647, %v81
  %v86 = vsub.f32 0.0, %v84
  %v87 = vsub.f32 0.0, %v85
  %v88 = vmul.f32 %v86, 1.442695
  %v89 = vpow.pop %v88
  %v90 = vmul.f32 %v87, 1.442695
  %v91 = vpow.pop %v90
  %v92 = vmax.f32 %v80, 0.0
  %v93 = vmax.f32 %v81, 0.0
  %v94 = vmul.f32 %v80, %v82
  %v95 = vmul.f32 %v81, %v83
  %v96 = vsub.f32 %v92, %v94
  %v97 = vsub.f32 %v93, %v95
  %v98 = vadd.f32 %v89, 1.0
  %v99 = vadd.f32 %v91, 1.0
  %v100 = vlog2.pop %v98
  %v101 = vmul.f32 %v100, 0.6931472
  %v102 = vlog2.pop %v99
  %v103 = vmul.f32 %v102, 0.6931472
  %v104 = vadd.f32 %v96, %v101
  %v105 = vadd.f32 %v97, %v103
  %v106 = vrcp.pop %v98
  %v107 = vrcp.pop %v99
  %vm108 = vcmp.ge.f32.partialorder %v80, 0.0
  %vm109 = vcmp.ge.f32.partialorder %v81, 0.0
  %v110 = vmul.f32 %v89, %v106
  %v111 = vmul.f32 %v91, %v107
  %v112 = vsel %vm108, %v106, %v110
  %v113 = vsel %vm109, %v107, %v111
  %v114 = vsub.f32 %v112, %v82
  %v115 = vsub.f32 %v113, %v83
  %v116 = vsub.f32 %v114, 1.0
  %v117 = vsub.f32 %v115, 1.0
  %v118 = vmul.f32 %v116, 19.96008
  %v119 = vmul.f32 %v117, 19.96008
  %v120 = vmul.f32 %v118, 1.442695
  %v121 = vpow.pop %v120
  %v122 = vmul.f32 %v119, 1.442695
  %v123 = vpow.pop %v122
  %v124 = vsub.f32 1.0, %v121
  %v125 = vsub.f32 1.0, %v123
  %v126 = vmul.f32 %v104, %v124
  %v127 = vmul.f32 %v105, %v125
  %v128 = vadd.f32 %v126, %v127
  %v129 = vld [vmem:[%s2] sm:$0xff]
  %v130 = vadd.f32 %v129, %v128
  %131 = vst [vmem:[%s2] sm:$0xff] %v130
  // Predicated region
  $region14: #{bce_blur_with_logits_loss.1} parent=0 // pred_check
    _
  $region15: #{bce_blur_with_logits_loss.1} parent=0 // pred_check_branch
    %133 = sbr.rel (0) target = $region17
  $region16: #{bce_blur_with_logits_loss.1} parent=0 // pred_region
    _
  $region17: #{bce_blur_with_logits_loss.1} parent=0 // pred_fallthru
    _
  // Predicated region
  $region18: #{bce_blur_with_logits_loss.1} parent=0 // pred_check
    _
  $region19: #{bce_blur_with_logits_loss.1} parent=0 // pred_check_branch
    %135 = sbr.rel (0) target = $region21
  $region20: #{bce_blur_with_logits_loss.1} parent=0 // pred_region
    _
  $region21: #{bce_blur_with_logits_loss.1} parent=0 // pred_fallthru
    _

</llo_original>
